<compile_context>
chip_gen: v7x
topology: tpu7x:2x2x1
jax: 0.10.0
libtpu: 0.0.40
codegen_flags: <defaults>
</compile_context>

<pallas_src>
import jax
import jax.numpy as jnp
from jax.experimental import pallas as pl
from jax.experimental.pallas import tpu as pltpu


def _round_up(x, m):
    return ((x + m - 1) // m) * m


# -----------------------------------------------------------------------------
# Pallas kernel: whole ensemble in one (M-tiled) grid step.
#   x_ref  : (TM, K_pad)      bf16  shared im2col patches (zero-padded K)
#   w1_ref : (K_pad, N1_pad)  bf16  all members' conv1 weights, concat on N
#   b1_ref : (1, N1_pad)      f32   all members' conv1 biases
#   w2_ref : (N1_pad, N2_pad) bf16  block-diagonal packing of members' 1x1 convs
#   b2_ref : (1, N2_pad)      f32   all members' conv2 biases
#   o_ref  : (TM, N2_pad)     f32   lane-dense output slab (col j -> member
#                                   j//C_out, channel j%C_out; padding dropped
#                                   outside the kernel)
# -----------------------------------------------------------------------------
def _fused_ensemble_kernel(x_ref, w1_ref, b1_ref, w2_ref, b2_ref, o_ref):
    # Layer 1: bf16 operands on the MXU, fp32 accumulation; bias + ReLU in fp32.
    h = jnp.dot(x_ref[...], w1_ref[...], preferred_element_type=jnp.float32)
    h = jnp.maximum(h + b1_ref[...], 0.0)                       # (TM, N1_pad) f32
    # Layer 2: bf16 operands again (zero rows of the block-diagonal w2 neutralize
    # the padded h columns), fp32 accumulation + fp32 bias.
    y = jnp.dot(h.astype(jnp.bfloat16), w2_ref[...],
                preferred_element_type=jnp.float32)              # (TM, N2_pad)
    o_ref[...] = (y + b2_ref[...]).astype(o_ref.dtype)


def _im2col_3x3_same(x_nhwc):
    """(B, H, W, C) -> (B*H*W, 9*C) patches for a 3x3 / stride-1 / pad-1 conv.

    Patch element ordering is (kh, kw, c), matching a PyTorch conv weight
    (O, I, kh, kw) transposed to (kh, kw, I, O) and reshaped to (9*I, O).
    """
    B, H, W, C = x_nhwc.shape
    xp = jnp.pad(x_nhwc, ((0, 0), (1, 1), (1, 1), (0, 0)))
    cols = []
    for dh in range(3):
        for dw in range(3):
            cols.append(xp[:, dh:dh + H, dw:dw + W, :])          # (B, H, W, C)
    patches = jnp.concatenate(cols, axis=-1)                     # (B, H, W, 9*C)
    return patches.reshape(B * H * W, 9 * C)


def bayesnet_forward(x_nchw, params):
    """Ensemble forward.  x_nchw: (B, C_in, H, W) float32.

    params: dict with
      w1: (S, 9*C_in, Hd)   b1: (S, 1, Hd)
      w2: (S, Hd, C_out)    b2: (S, 1, C_out)
    Returns (S, B, C_out, H, W) float32 — same convention as torch.stack of
    per-member NCHW outputs.
    """
    B, C_in, H, W = x_nchw.shape
    S, K1, Hd = params["w1"].shape
    C_out = params["w2"].shape[-1]
    M = B * H * W

    # ---- padded / fused dimensions -----------------------------------------
    # K only padded to a multiple of 16 (block covers the full K dim); padding
    # to 128 would triple the HBM bytes of the dominant input for zero MXU gain.
    K_pad = _round_up(K1, 16)
    N1 = S * Hd                           # fused layer-1 output width
    N1_pad = _round_up(N1, 128)
    N2 = S * C_out                        # fused layer-2 output width
    N2_pad = _round_up(N2, 128)           # lane-dense (unmasked) output stores

    # M tiling: TM <= 512 rows; force >= 2 grid steps when possible so the
    # "parallel" M axis shards across v7x's two TensorCores (and per-TC tiles
    # stay well inside the 64 MiB v7x VMEM).  On single-TC v5e/v6e larger TM
    # (up to 1024) is a further small win for very large M.
    M_rows = _round_up(M, 8)
    TM = min(512, M_rows)
    if M_rows >= 16:
        TM = min(TM, _round_up((M_rows + 1) // 2, 8))
    M_pad = _round_up(M, TM)

    # ---- glue (plain JAX / XLA, done once): layout, im2col, weight packing ---
    x_nhwc = jnp.transpose(x_nchw, (0, 2, 3, 1)).astype(jnp.bfloat16)
    x_col = _im2col_3x3_same(x_nhwc)                              # (M, K1) bf16
    x_pad = jnp.pad(x_col, ((0, M_pad - M), (0, K_pad - K1)))     # single pad op

    # conv1 weights of all members concatenated along the matmul N dimension.
    w1_all = jnp.transpose(params["w1"], (1, 0, 2)).reshape(K1, N1)
    w1_all = jnp.pad(w1_all, ((0, K_pad - K1), (0, N1_pad - N1))).astype(jnp.bfloat16)
    b1_all = jnp.pad(params["b1"].reshape(1, N1),
                     ((0, 0), (0, N1_pad - N1))).astype(jnp.float32)

    # conv2 (1x1) weights packed block-diagonally without a Python .at[].set()
    # loop: member s occupies rows [s*Hd:(s+1)*Hd], cols [s*C_out:(s+1)*C_out].
    eye = jnp.eye(S, dtype=params["w2"].dtype)
    w2_bd = jnp.einsum("shc,st->shtc", params["w2"], eye).reshape(N1, N2)
    w2_bd = jnp.pad(w2_bd, ((0, N1_pad - N1), (0, N2_pad - N2))).astype(jnp.bfloat16)
    b2_all = jnp.pad(params["b2"].reshape(1, N2),
                     ((0, 0), (0, N2_pad - N2))).astype(jnp.float32)

    # ---- explicit VMEM budget (v5e default scoped limit is only 16 MiB; v7x
    #      physical VMEM is 64 MiB/TC) ---------------------------------------
    vmem_est = (
        2 * TM * K_pad * 2            # double-buffered bf16 x tile
        + K_pad * N1_pad * 2          # resident w1 (bf16)
        + N1_pad * N2_pad * 2         # resident block-diag w2 (bf16)
        + (N1_pad + N2_pad) * 4       # biases (fp32)
        + 2 * TM * N2_pad * 4         # double-buffered fp32 output tile
        + TM * N1_pad * 4             # live fp32 intermediate h
    )
    vmem_limit = int(min(max(2 * vmem_est + (8 << 20), 32 << 20), 56 << 20))

    # ---- fused Pallas hot path ----------------------------------------------
    out_flat = pl.pallas_call(
        _fused_ensemble_kernel,
        out_shape=jax.ShapeDtypeStruct((M_pad, N2_pad), jnp.float32),
        grid_spec=pltpu.PrefetchScalarGridSpec(
            num_scalar_prefetch=0,
            grid=(M_pad // TM,),
            in_specs=[
                pl.BlockSpec((TM, K_pad), lambda m: (m, 0)),        # im2col tile
                pl.BlockSpec((K_pad, N1_pad), lambda m: (0, 0)),    # fused w1 (resident)
                pl.BlockSpec((1, N1_pad), lambda m: (0, 0)),        # fused b1 (resident)
                pl.BlockSpec((N1_pad, N2_pad), lambda m: (0, 0)),   # block-diag w2
                pl.BlockSpec((1, N2_pad), lambda m: (0, 0)),        # fused b2
            ],
            out_specs=pl.BlockSpec((TM, N2_pad), lambda m: (m, 0)),  # lane-dense output
        ),
        compiler_params=pltpu.CompilerParams(
            dimension_semantics=("parallel",),
            vmem_limit_bytes=vmem_limit),
    )(x_pad, w1_all, b1_all, w2_bd, b2_all)

    # ---- glue: (M_pad, N2_pad) -> (S, B, C_out, H, W) ------------------------
    y = out_flat[:M, :N2].reshape(M, S, C_out)
    y = jnp.transpose(y, (1, 0, 2))                                # (S, M, C_out)
    out = y.reshape(S, B, H, W, C_out)
    return jnp.transpose(out, (0, 1, 4, 2, 3))


def init_params(key, n_samples, c_in, hidden, c_out):
    """Deterministic xavier-normal-ish init per ensemble member (reset_parameters analog)."""
    k1, k2, kb = jax.random.split(key, 3)
    K1 = 9 * c_in
    std1 = (2.0 / (K1 + hidden)) ** 0.5
    std2 = (2.0 / (hidden + c_out)) ** 0.5
    w1 = std1 * jax.random.normal(k1, (n_samples, K1, hidden), jnp.float32)
    w2 = std2 * jax.random.normal(k2, (n_samples, hidden, c_out), jnp.float32)
    b1 = jnp.zeros((n_samples, 1, hidden), jnp.float32)
    b2 = jnp.zeros((n_samples, 1, c_out), jnp.float32)
    # Per-member log_beta parameter (Gamma-prior sample analog); unused in forward.
    log_beta = jnp.log(1.0 + jax.random.uniform(kb, (n_samples,), jnp.float32))
    return {"w1": w1, "b1": b1, "w2": w2, "b2": b2, "log_beta": log_beta}


def _reference_forward(x_nchw, params):
    """Pure-JAX fp32 reference for correctness checking (same math, no Pallas)."""
    B, C_in, H, W = x_nchw.shape
    x_col = _im2col_3x3_same(jnp.transpose(x_nchw, (0, 2, 3, 1)))
    h = jnp.maximum(jnp.einsum("mk,skh->smh", x_col, params["w1"]) + params["b1"], 0.0)
    y = jnp.einsum("smh,sho->smo", h, params["w2"]) + params["b2"]
    S, _, C_out = y.shape
    return jnp.transpose(y.reshape(S, B, H, W, C_out), (0, 1, 4, 2, 3))


if __name__ == "__main__":
    # Small shapes consistent with the module: NCHW input, ensemble of n_samples nets.
    n_samples, B, C_in, H, W = 3, 2, 4, 16, 16
    hidden, C_out = 32, 4

    key = jax.random.PRNGKey(0)
    kx, kp = jax.random.split(key)
    x = jax.random.normal(kx, (B, C_in, H, W), jnp.float32)
    params = init_params(kp, n_samples, C_in, hidden, C_out)

    fwd = jax.jit(bayesnet_forward)
    out = jax.block_until_ready(fwd(x, params))

    ref = _reference_forward(x, params)
    assert out.shape == (n_samples, B, C_out, H, W), out.shape
    # bf16 MXU operands with fp32 accumulation: tolerance relaxed vs fp32 reference.
    max_err = float(jnp.max(jnp.abs(out - ref)))
    assert jnp.allclose(out, ref, atol=5e-2, rtol=5e-2), (
        f"mismatch vs JAX reference (max abs err {max_err:.4e})")

    # TODO(synk): SVGD training utilities (_log_joint, _compute_mse_nlp, Gamma prior
    # sampling, predict() variance) are not part of forward() and stay in plain JAX.
    print("KERNEL_OK")
</pallas_src>

<mosaic_0001>
module attributes {stable_mosaic.version = 11 : i64} {
  func.func @_fused_ensemble_kernel(%arg0: i32, %arg1: memref<256x48xbf16, #tpu.memory_space<vmem>>, %arg2: memref<48x128xbf16, #tpu.memory_space<vmem>>, %arg3: memref<1x128xf32, #tpu.memory_space<vmem>>, %arg4: memref<128x128xbf16, #tpu.memory_space<vmem>>, %arg5: memref<1x128xf32, #tpu.memory_space<vmem>>, %arg6: memref<256x128xf32, #tpu.memory_space<vmem>>) attributes {dimension_semantics = [#tpu.dimension_semantics<parallel>], iteration_bounds = array<i64: 2>, scalar_prefetch = 0 : i64, scratch_operands = 0 : i64, tpu.core_type = #tpu.core_type<tc>, window_params = [{transform_indices = @transform_0, window_bounds = array<i64: 256, 48>}, {pipeline_mode = #tpu.pipeline_mode<synchronous>, transform_indices = @transform_1, window_bounds = array<i64: 48, 128>}, {pipeline_mode = #tpu.pipeline_mode<synchronous>, transform_indices = @transform_2, window_bounds = array<i64: 1, 128>}, {pipeline_mode = #tpu.pipeline_mode<synchronous>, transform_indices = @transform_3, window_bounds = array<i64: 128, 128>}, {pipeline_mode = #tpu.pipeline_mode<synchronous>, transform_indices = @transform_4, window_bounds = array<i64: 1, 128>}, {transform_indices = @transform_5, window_bounds = array<i64: 256, 128>}]} {
    %c0 = arith.constant 0 : index
    %c0_0 = arith.constant 0 : index
    %0 = vector.load %arg1[%c0, %c0_0] : memref<256x48xbf16, #tpu.memory_space<vmem>>, vector<256x48xbf16>
    %c0_1 = arith.constant 0 : index
    %c0_2 = arith.constant 0 : index
    %1 = vector.load %arg2[%c0_1, %c0_2] : memref<48x128xbf16, #tpu.memory_space<vmem>>, vector<48x128xbf16>
    %cst = arith.constant dense<0.000000e+00> : vector<256x128xf32>
    %2 = tpu.matmul %0, %1, %cst {dimension_numbers = #tpu.dot_dimension_numbers<[1], [0], [0], [1], [0, 0, 1, 1], [], []>} : vector<256x48xbf16>, vector<48x128xbf16>, vector<256x128xf32> -> vector<256x128xf32>
    %c0_3 = arith.constant 0 : index
    %c0_4 = arith.constant 0 : index
    %3 = vector.load %arg3[%c0_3, %c0_4] : memref<1x128xf32, #tpu.memory_space<vmem>>, vector<1x128xf32>
    %4 = vector.broadcast %3 : vector<1x128xf32> to vector<256x128xf32>
    %5 = arith.addf %2, %4 : vector<256x128xf32>
    %cst_5 = arith.constant 0.000000e+00 : f32
    %6 = vector.broadcast %cst_5 : f32 to vector<256x128xf32>
    %7 = arith.maximumf %5, %6 : vector<256x128xf32>
    %8 = arith.truncf %7 : vector<256x128xf32> to vector<256x128xbf16>
    %c0_6 = arith.constant 0 : index
    %c0_7 = arith.constant 0 : index
    %9 = vector.load %arg4[%c0_6, %c0_7] : memref<128x128xbf16, #tpu.memory_space<vmem>>, vector<128x128xbf16>
    %cst_8 = arith.constant dense<0.000000e+00> : vector<256x128xf32>
    %10 = tpu.matmul %8, %9, %cst_8 {dimension_numbers = #tpu.dot_dimension_numbers<[1], [0], [0], [1], [0, 0, 1, 1], [], []>} : vector<256x128xbf16>, vector<128x128xbf16>, vector<256x128xf32> -> vector<256x128xf32>
    %c0_9 = arith.constant 0 : index
    %c0_10 = arith.constant 0 : index
    %11 = vector.load %arg5[%c0_9, %c0_10] : memref<1x128xf32, #tpu.memory_space<vmem>>, vector<1x128xf32>
    %12 = vector.broadcast %11 : vector<1x128xf32> to vector<256x128xf32>
    %13 = arith.addf %10, %12 : vector<256x128xf32>
    %c0_11 = arith.constant 0 : index
    %c0_12 = arith.constant 0 : index
    %14 = vector.load %arg6[%c0_11, %c0_12] : memref<256x128xf32, #tpu.memory_space<vmem>>, vector<256x128xf32>
    tpu.vector_store %arg6[%c0_11, %c0_12], %13 {strides = array<i32>} : memref<256x128xf32, #tpu.memory_space<vmem>>, vector<256x128xf32>,
    return
  }
  func.func @transform_0(%arg0: i32) -> (i32, i32) {
    %c0_i32 = arith.constant 0 : i32
    %c0_i32_0 = arith.constant 0 : i32
    return %arg0, %c0_i32 : i32, i32
  }
  func.func @transform_1(%arg0: i32) -> (i32, i32) {
    %c0_i32 = arith.constant 0 : i32
    %c0_i32_0 = arith.constant 0 : i32
    %c0_i32_1 = arith.constant 0 : i32
    return %c0_i32, %c0_i32_0 : i32, i32
  }
  func.func @transform_2(%arg0: i32) -> (i32, i32) {
    %c0_i32 = arith.constant 0 : i32
    %c0_i32_0 = arith.constant 0 : i32
    %c0_i32_1 = arith.constant 0 : i32
    return %c0_i32, %c0_i32_0 : i32, i32
  }
  func.func @transform_3(%arg0: i32) -> (i32, i32) {
    %c0_i32 = arith.constant 0 : i32
    %c0_i32_0 = arith.constant 0 : i32
    %c0_i32_1 = arith.constant 0 : i32
    return %c0_i32, %c0_i32_0 : i32, i32
  }
  func.func @transform_4(%arg0: i32) -> (i32, i32) {
    %c0_i32 = arith.constant 0 : i32
    %c0_i32_0 = arith.constant 0 : i32
    %c0_i32_1 = arith.constant 0 : i32
    return %c0_i32, %c0_i32_0 : i32, i32
  }
  func.func @transform_5(%arg0: i32) -> (i32, i32) {
    %c0_i32 = arith.constant 0 : i32
    %c0_i32_0 = arith.constant 0 : i32
    return %arg0, %c0_i32 : i32, i32
  }
}

</mosaic_0001>

<llo_original>
// kernel: bayesnet_forward.1
$region0: #{bayesnet_forward.1}
  #allocation0 [shape = 'u32[]', space=smem, size = 0x4, offset = 0x4, fixed_abs, tag = 'smem constant byte address 0x4 - core index']
  #allocation1 [shape = 'u32[144,128]{1,0:T(1,128)}', space=vmem, size = 0x12000, scoped, tag = 'internal scratch']
  %s0 = inlined_call_operand.vmem [shape: bf16[512,48], index: 0, kind: input, shape index: {}]
  %s1 = inlined_call_operand.vmem [shape: bf16[48,128], index: 1, kind: input, shape index: {}]
  %s2 = inlined_call_operand.vmem [shape: f32[1,128], index: 2, kind: input, shape index: {}]
  %s3 = inlined_call_operand.vmem [shape: bf16[128,128], index: 3, kind: input, shape index: {}]
  %s4 = inlined_call_operand.vmem [shape: f32[1,128], index: 4, kind: input, shape index: {}]
  %s5 = inlined_call_operand.vmem [shape: f32[512,128], index: 5, kind: output, shape index: {}]
  %s6 = sld [smem:[#allocation0]]
  $region53: #{bayesnet_forward.1} parent=0
    _
  %s8 = ssub.s32 1, %s6
  %s9 = scalar_select 0, %s8, %s6
  loop: start=0, step=1, limit=4
  $region2: #{bayesnet_forward.1} parent=0 // loop_pre_header
    _
  $region3: #{bayesnet_forward.1} parent=0 // loop_header
    %s11 = sphi 0, %s15
    %p12 = scmp.ge.s32.totalorder %s11, 4
    %s21 = sphi 0, %s23
    %s24 = sphi 0, %s21
    %s25 = sphi 0, %s24
    %s41 = sphi 0, %s25
    %s45 = sphi 0, %s45
    %s47 = sphi 0, %s45
    %s48 = sphi 0, %s47
    %s62 = sphi 0, %s48
    %s66 = sphi 0, %s66
    %s68 = sphi 0, %s66
    %s69 = sphi 0, %s68
    %s83 = sphi 0, %s69
    %s87 = sphi 0, %s87
    %s89 = sphi 0, %s87
    %s90 = sphi 0, %s89
    %s104 = sphi 0, %s90
    %s108 = sphi 0, %s108
    %s110 = sphi 0, %s108
    %s111 = sphi 0, %s110
    %s125 = sphi 0, %s111
    %s131 = sphi 0, %s133
    %s134 = sphi 0, %s131
    %s135 = sphi 0, %s134
    %s151 = sphi 0, %s135
  $region4: #{bayesnet_forward.1} parent=0 // loop_header_branch
    %14 = sbr.rel (%p12) target = $region8
  $region5: #{bayesnet_forward.1} parent=0 // loop_body
    %s16 = ssub.s32 %s11, 1
    %s17 = ssub.s32 %s11, 2
    %s18 = sadd.s32 %s11, 1
    %s19 = ssub.s32 %s11, %s18
    %p20 = scmp.eq.s32.totalorder %s19, 0
    %s22 = sadd.s32 %s21, 1
    %s23 = scalar_select %p20, %s21, %s22
    %p26 = pneg %p20
    %p27 = scmp.eq.s32.totalorder %s11, 1
    %p28 = por %p26, %p27
    %p29 = scmp.ne.s32.totalorder %s21, %s24
    %p30 = scmp.eq.s32.totalorder %s11, 0
    %p31 = por %p29, %p30
    %p32 = scmp.ne.s32.totalorder %s21, %s24
    %p33 = scmp.eq.s32.totalorder %s16, 1
    %p34 = por %p32, %p33
    %p35 = scmp.ne.s32.totalorder %s24, %s25
    %p36 = scmp.eq.s32.totalorder %s16, 0
    %p37 = por %p35, %p36
    %p38 = scmp.ne.s32.totalorder %s24, %s25
    %p39 = scmp.eq.s32.totalorder %s17, 1
    %p40 = por %p38, %p39
    %p42 = scmp.ne.s32.totalorder %s25, %s41
    %p43 = scmp.eq.s32.totalorder %s17, 0
    %p44 = por %p42, %p43
    %s46 = sadd.s32 %s45, 1
    %p49 = scmp.eq.s32.totalorder %s11, 1
    %p50 = scmp.ne.s32.totalorder %s45, %s47
    %p51 = scmp.eq.s32.totalorder %s11, 0
    %p52 = por %p50, %p51
    %p53 = scmp.ne.s32.totalorder %s45, %s47
    %p54 = scmp.eq.s32.totalorder %s16, 1
    %p55 = por %p53, %p54
    %p56 = scmp.ne.s32.totalorder %s47, %s48
    %p57 = scmp.eq.s32.totalorder %s16, 0
    %p58 = por %p56, %p57
    %p59 = scmp.ne.s32.totalorder %s47, %s48
    %p60 = scmp.eq.s32.totalorder %s17, 1
    %p61 = por %p59, %p60
    %p63 = scmp.ne.s32.totalorder %s48, %s62
    %p64 = scmp.eq.s32.totalorder %s17, 0
    %p65 = por %p63, %p64
    %s67 = sadd.s32 %s66, 1
    %p70 = scmp.eq.s32.totalorder %s11, 1
    %p71 = scmp.ne.s32.totalorder %s66, %s68
    %p72 = scmp.eq.s32.totalorder %s11, 0
    %p73 = por %p71, %p72
    %p74 = scmp.ne.s32.totalorder %s66, %s68
    %p75 = scmp.eq.s32.totalorder %s16, 1
    %p76 = por %p74, %p75
    %p77 = scmp.ne.s32.totalorder %s68, %s69
    %p78 = scmp.eq.s32.totalorder %s16, 0
    %p79 = por %p77, %p78
    %p80 = scmp.ne.s32.totalorder %s68, %s69
    %p81 = scmp.eq.s32.totalorder %s17, 1
    %p82 = por %p80, %p81
    %p84 = scmp.ne.s32.totalorder %s69, %s83
    %p85 = scmp.eq.s32.totalorder %s17, 0
    %p86 = por %p84, %p85
    %s88 = sadd.s32 %s87, 1
    %p91 = scmp.eq.s32.totalorder %s11, 1
    %p92 = scmp.ne.s32.totalorder %s87, %s89
    %p93 = scmp.eq.s32.totalorder %s11, 0
    %p94 = por %p92, %p93
    %p95 = scmp.ne.s32.totalorder %s87, %s89
    %p96 = scmp.eq.s32.totalorder %s16, 1
    %p97 = por %p95, %p96
    %p98 = scmp.ne.s32.totalorder %s89, %s90
    %p99 = scmp.eq.s32.totalorder %s16, 0
    %p100 = por %p98, %p99
    %p101 = scmp.ne.s32.totalorder %s89, %s90
    %p102 = scmp.eq.s32.totalorder %s17, 1
    %p103 = por %p101, %p102
    %p105 = scmp.ne.s32.totalorder %s90, %s104
    %p106 = scmp.eq.s32.totalorder %s17, 0
    %p107 = por %p105, %p106
    %s109 = sadd.s32 %s108, 1
    %p112 = scmp.eq.s32.totalorder %s11, 1
    %p113 = scmp.ne.s32.totalorder %s108, %s110
    %p114 = scmp.eq.s32.totalorder %s11, 0
    %p115 = por %p113, %p114
    %p116 = scmp.ne.s32.totalorder %s108, %s110
    %p117 = scmp.eq.s32.totalorder %s16, 1
    %p118 = por %p116, %p117
    %p119 = scmp.ne.s32.totalorder %s110, %s111
    %p120 = scmp.eq.s32.totalorder %s16, 0
    %p121 = por %p119, %p120
    %p122 = scmp.ne.s32.totalorder %s110, %s111
    %p123 = scmp.eq.s32.totalorder %s17, 1
    %p124 = por %p122, %p123
    %p126 = scmp.ne.s32.totalorder %s111, %s125
    %p127 = scmp.eq.s32.totalorder %s17, 0
    %p128 = por %p126, %p127
    %s129 = ssub.s32 %s11, %s18
    %p130 = scmp.eq.s32.totalorder %s129, 0
    %s132 = sadd.s32 %s131, 1
    %s133 = scalar_select %p130, %s131, %s132
    %p136 = pneg %p130
    %p137 = scmp.eq.s32.totalorder %s11, 1
    %p138 = por %p136, %p137
    %p139 = scmp.ne.s32.totalorder %s131, %s134
    %p140 = scmp.eq.s32.totalorder %s11, 0
    %p141 = por %p139, %p140
    %p142 = scmp.ne.s32.totalorder %s131, %s134
    %p143 = scmp.eq.s32.totalorder %s16, 1
    %p144 = por %p142, %p143
    %p145 = scmp.ne.s32.totalorder %s134, %s135
    %p146 = scmp.eq.s32.totalorder %s16, 0
    %p147 = por %p145, %p146
    %p148 = scmp.ne.s32.totalorder %s134, %s135
    %p149 = scmp.eq.s32.totalorder %s17, 1
    %p150 = por %p148, %p149
    %p152 = scmp.ne.s32.totalorder %s135, %s151
    %p153 = scmp.eq.s32.totalorder %s17, 0
    %p154 = por %p152, %p153
    %p155 = scmp.le.s32.totalorder 1, %s11
    %p156 = scmp.lt.s32.totalorder %s11, 3
    %p157 = pnand %p155, %p156
    %p158 = pneg %p157
    // Predicated region
    $region9: #{bayesnet_forward.1} parent=5 // pred_check
      _
    $region10: #{bayesnet_forward.1} parent=5 // pred_check_branch
      %160 = sbr.rel (%p157) target = $region12
    $region11: #{bayesnet_forward.1} parent=5 // pred_region
      %s161 = ssub.s32 %s11, 1
      // Predicated region
      $region13: #{bayesnet_forward.1} parent=11 // pred_check
        %p162 = pneg %p58
      $region14: #{bayesnet_forward.1} parent=11 // pred_check_branch
        %164 = sbr.rel (%p162) target = $region16
      $region15: #{bayesnet_forward.1} parent=11 // pred_region
        _
      $region16: #{bayesnet_forward.1} parent=11 // pred_fallthru
        _
      // Predicated region
      $region17: #{bayesnet_forward.1} parent=11 // pred_check
        %p165 = pneg %p79
      $region18: #{bayesnet_forward.1} parent=11 // pred_check_branch
        %167 = sbr.rel (%p165) target = $region20
      $region19: #{bayesnet_forward.1} parent=11 // pred_region
        _
      $region20: #{bayesnet_forward.1} parent=11 // pred_fallthru
        _
      // Predicated region
      $region21: #{bayesnet_forward.1} parent=11 // pred_check
        %p168 = pneg %p100
      $region22: #{bayesnet_forward.1} parent=11 // pred_check_branch
        %170 = sbr.rel (%p168) target = $region24
      $region23: #{bayesnet_forward.1} parent=11 // pred_region
        _
      $region24: #{bayesnet_forward.1} parent=11 // pred_fallthru
        _
      // Predicated region
      $region25: #{bayesnet_forward.1} parent=11 // pred_check
        %p171 = pneg %p121
      $region26: #{bayesnet_forward.1} parent=11 // pred_check_branch
        %173 = sbr.rel (%p171) target = $region28
      $region27: #{bayesnet_forward.1} parent=11 // pred_region
        _
      $region28: #{bayesnet_forward.1} parent=11 // pred_fallthru
        _
    $region12: #{bayesnet_forward.1} parent=5 // pred_fallthru
      _
    %p174 = scmp.lt.s32.totalorder %s11, 2
    // Predicated region
    $region29: #{bayesnet_forward.1} parent=5 // pred_check
      %p175 = pneg %p174
    $region30: #{bayesnet_forward.1} parent=5 // pred_check_branch
      %177 = sbr.rel (%p175) target = $region32
    $region31: #{bayesnet_forward.1} parent=5 // pred_region
      // Predicated region
      $region33: #{bayesnet_forward.1} parent=31 // pred_check
        %p178 = pneg %p31
      $region34: #{bayesnet_forward.1} parent=31 // pred_check_branch
        %180 = sbr.rel (%p178) target = $region36
      $region35: #{bayesnet_forward.1} parent=31 // pred_region
        %s181 = smul.u32 32, %s11
        %p182 = scmp.lt.s32.totalorder %s181, 63
        %s183 = scalar_select %p182, %s181, 63
        %s184 = smul.addr %s183, 4
        %s185 = scalar_lea.vmem %s0, %s184
        %s186 = smul.u32 32, %s11
      $region36: #{bayesnet_forward.1} parent=31 // pred_fallthru
        _
    $region32: #{bayesnet_forward.1} parent=5 // pred_fallthru
      _
    %p187 = scmp.le.s32.totalorder 1, %s11
    %p188 = scmp.lt.s32.totalorder %s11, 3
    %p189 = pnand %p187, %p188
    %p190 = pneg %p189
    // Predicated region
    $region37: #{bayesnet_forward.1} parent=5 // pred_check
      _
    $region38: #{bayesnet_forward.1} parent=5 // pred_check_branch
      %192 = sbr.rel (%p189) target = $region40
    $region39: #{bayesnet_forward.1} parent=5 // pred_region
      %s193 = ssub.s32 %s11, 1
      %s194 = smul.u32 32, %s16
      %p195 = scmp.lt.s32.totalorder %s194, 63
      %s196 = scalar_select %p195, %s194, 63
      %s197 = smul.addr %s196, 4
      %s198 = scalar_lea.vmem %s0, %s197
      %p199 = pneg %p37
      %p200 = pneg %p34
      %p201 = pneg %p58
      %p202 = pneg %p55
      %p203 = pneg %p79
      %p204 = pneg %p76
      %p205 = pneg %p100
      %p206 = pneg %p97
      %p207 = pneg %p121
      %p208 = pneg %p118
      %p209 = pneg %p147
      %p210 = pneg %p144
      %s211 = smul.u32 32, %s16
      %p212 = scmp.lt.s32.totalorder %s211, 63
      %s213 = scalar_select %p212, %s211, 63
      %s214 = smul.addr %s213, 8
      %s215 = scalar_lea.vmem %s5, %s214
      %s216 = smul.u32 32, %s16
      %p217 = scmp.lt.s32.totalorder %s216, 63
      %s218 = scalar_select %p217, %s216, 63
      %s219 = smul.addr %s218, 4
      %s220 = scalar_lea.vmem %s0, %s219
      %s221 = smul.u32 32, %s16
      %s222 = smul.u32 32, %s16
      %p223 = scmp.lt.s32.totalorder %s222, 63
      %s224 = scalar_select %p223, %s222, 63
      %s225 = smul.addr %s224, 8
      %s226 = scalar_lea.vmem %s5, %s225
      %s227 = smul.u32 32, %s16
      %v229 = vld [vmem:[%s220] sm:$0xf]
      %v230 = vld [vmem:[%s220 + $0x4] sm:$0xf]
      %v231 = vld [vmem:[%s220 + $0x8] sm:$0xf]
      %v232 = vld [vmem:[%s220 + $0xc] sm:$0xf]
      %v233 = vld [vmem:[%s220 + $0x10] sm:$0xf]
      %v234 = vld [vmem:[%s220 + $0x14] sm:$0xf]
      %v235 = vld [vmem:[%s220 + $0x18] sm:$0xf]
      %v236 = vld [vmem:[%s220 + $0x1c] sm:$0xf]
      %v237 = vld [vmem:[%s220 + $0x20] sm:$0xf]
      %v238 = vld [vmem:[%s220 + $0x24] sm:$0xf]
      %v239 = vld [vmem:[%s220 + $0x28] sm:$0xf]
      %v240 = vld [vmem:[%s220 + $0x2c] sm:$0xf]
      %v241 = vld [vmem:[%s220 + $0x30] sm:$0xf]
      %v242 = vld [vmem:[%s220 + $0x34] sm:$0xf]
      %v243 = vld [vmem:[%s220 + $0x38] sm:$0xf]
      %v244 = vld [vmem:[%s220 + $0x3c] sm:$0xf]
      %v245 = vld [vmem:[%s220 + $0x40] sm:$0xf]
      %v246 = vld [vmem:[%s220 + $0x44] sm:$0xf]
      %v247 = vld [vmem:[%s220 + $0x48] sm:$0xf]
      %v248 = vld [vmem:[%s220 + $0x4c] sm:$0xf]
      %v249 = vld [vmem:[%s220 + $0x50] sm:$0xf]
      %v250 = vld [vmem:[%s220 + $0x54] sm:$0xf]
      %v251 = vld [vmem:[%s220 + $0x58] sm:$0xf]
      %v252 = vld [vmem:[%s220 + $0x5c] sm:$0xf]
      %v253 = vld [vmem:[%s220 + $0x60] sm:$0xf]
      %v254 = vld [vmem:[%s220 + $0x64] sm:$0xf]
      %v255 = vld [vmem:[%s220 + $0x68] sm:$0xf]
      %v256 = vld [vmem:[%s220 + $0x6c] sm:$0xf]
      %v257 = vld [vmem:[%s220 + $0x70] sm:$0xf]
      %v258 = vld [vmem:[%s220 + $0x74] sm:$0xf]
      %v259 = vld [vmem:[%s220 + $0x78] sm:$0xf]
      %v260 = vld [vmem:[%s220 + $0x7c] sm:$0xf]
      %v261 = vld [vmem:[%s1] sm:$0xf]
      %v262 = vld [vmem:[%s1 + $0x4] sm:$0xf]
      %v263 = vld [vmem:[%s1 + $0x8] sm:$0xf]
      %v264 = vld [vmem:[%s1 + $0xc] sm:$0xf]
      %v265 = vld [vmem:[%s1 + $0x10] sm:$0xf]
      %v266 = vld [vmem:[%s1 + $0x14] sm:$0xf]
      %v267 = vld [vmem:[%s2] sm:$0x1]
      %v269 = vlaneseq
      %v270 = vshrl.u32 %v269, 7
      %v271 = vsub.s32 0, %v270
      %v272 = vrot.slane %v267, %v271
      %v306 = vunpack.c.l.b16 %v229
      %v307 = vunpack.c.l.b16 %v230
      %v308 = vunpack.c.l.b16 %v231
      %v309 = vunpack.c.l.b16 %v232
      %v310 = vunpack.c.l.b16 %v233
      %v311 = vunpack.c.l.b16 %v234
      %v312 = vunpack.c.l.b16 %v235
      %v313 = vunpack.c.l.b16 %v236
      %v314 = vunpack.c.l.b16 %v237
      %v315 = vunpack.c.l.b16 %v238
      %v316 = vunpack.c.l.b16 %v239
      %v317 = vunpack.c.l.b16 %v240
      %v318 = vunpack.c.l.b16 %v241
      %v319 = vunpack.c.l.b16 %v242
      %v320 = vunpack.c.l.b16 %v243
      %v321 = vunpack.c.l.b16 %v244
      %v322 = vunpack.c.l.b16 %v245
      %v323 = vunpack.c.l.b16 %v246
      %v324 = vunpack.c.l.b16 %v247
      %v325 = vunpack.c.l.b16 %v248
      %v326 = vunpack.c.l.b16 %v249
      %v327 = vunpack.c.l.b16 %v250
      %v328 = vunpack.c.l.b16 %v251
      %v329 = vunpack.c.l.b16 %v252
      %v330 = vunpack.c.l.b16 %v253
      %v331 = vunpack.c.l.b16 %v254
      %v332 = vunpack.c.l.b16 %v255
      %v333 = vunpack.c.l.b16 %v256
      %v334 = vunpack.c.l.b16 %v257
      %v335 = vunpack.c.l.b16 %v258
      %v336 = vunpack.c.l.b16 %v259
      %v337 = vunpack.c.l.b16 %v260
      %v338 = vpack.c.b16 %v307, %v306
      %v339 = vpack.c.b16 %v309, %v308
      %v340 = vpack.c.b16 %v311, %v310
      %v341 = vpack.c.b16 %v313, %v312
      %v342 = vpack.c.b16 %v315, %v314
      %v343 = vpack.c.b16 %v317, %v316
      %v344 = vpack.c.b16 %v319, %v318
      %v345 = vpack.c.b16 %v321, %v320
      %v346 = vpack.c.b16 %v323, %v322
      %v347 = vpack.c.b16 %v325, %v324
      %v348 = vpack.c.b16 %v327, %v326
      %v349 = vpack.c.b16 %v329, %v328
      %v350 = vpack.c.b16 %v331, %v330
      %v351 = vpack.c.b16 %v333, %v332
      %v352 = vpack.c.b16 %v335, %v334
      %v353 = vpack.c.b16 %v337, %v336
      %v360 = vunpack.c.l.b16 %v261
      %v361 = vunpack.c.l.b16 %v262
      %v362 = vunpack.c.l.b16 %v263
      %v363 = vunpack.c.l.b16 %v264
      %v364 = vunpack.c.l.b16 %v265
      %v365 = vunpack.c.l.b16 %v266
      %v366 = vpack.c.b16 %v361, %v360
      %v367 = vpack.c.b16 %v363, %v362
      %v368 = vpack.c.b16 %v365, %v364
      %vm372 = vcmask 392192
      %v374 = vsel %vm372, %v338, 0
      %v377 = vsel %vm372, %v339, 0
      %v380 = vsel %vm372, %v340, 0
      %v383 = vsel %vm372, %v341, 0
      %v386 = vsel %vm372, %v342, 0
      %v389 = vsel %vm372, %v343, 0
      %v392 = vsel %vm372, %v344, 0
      %v395 = vsel %vm372, %v345, 0
      %v398 = vsel %vm372, %v346, 0
      %v401 = vsel %vm372, %v347, 0
      %v404 = vsel %vm372, %v348, 0
      %v407 = vsel %vm372, %v349, 0
      %v410 = vsel %vm372, %v350, 0
      %v413 = vsel %vm372, %v351, 0
      %v416 = vsel %vm372, %v352, 0
      %v419 = vsel %vm372, %v353, 0
      %421 = vmatprep.subr.bf16.mxu0 0
      %422 = vmatpush1.bf16.msra.mxu0 %v366
      %423 = vmatprep.subr.bf16.mxu0 0
      %424 = vmatpush1.bf16.msra.mxu0 %v367
      %425 = vmatprep.subr.bf16.mxu0 0
      %426 = vmatpush1.bf16.msra.mxu0 %v368
      %427 = vmatprep.subr.bf16.mxu0 0
      %428 = vmatpush1.bf16.msra.mxu0 0
      %429 = vmatprep.subr.bf16.mxu0 0
      %430 = vmatpush1.bf16.msra.mxu0 0
      %431 = vmatprep.subr.bf16.mxu0 0
      %432 = vmatpush1.bf16.msra.mxu0 0
      %433 = vmatprep.subr.bf16.mxu0 0
      %434 = vmatpush1.bf16.msra.mxu0 0
      %435 = vmatprep.subr.bf16.mxu0 0
      %436 = vmatpush1.bf16.msra.mxu0 0
      %437 = vmatprep.subr.bf16.mxu0 0
      %438 = vmatpush1.bf16.msra.mxu0 0
      %439 = vmatprep.subr.bf16.mxu0 0
      %440 = vmatpush1.bf16.msra.mxu0 0
      %441 = vmatprep.subr.bf16.mxu0 0
      %442 = vmatpush1.bf16.msra.mxu0 0
      %443 = vmatprep.subr.bf16.mxu0 0
      %444 = vmatpush1.bf16.msra.mxu0 0
      %445 = vmatprep.subr.bf16.mxu0 0
      %446 = vmatpush1.bf16.msra.mxu0 0
      %447 = vmatprep.subr.bf16.mxu0 0
      %448 = vmatpush1.bf16.msra.mxu0 0
      %449 = vmatprep.subr.bf16.mxu0 0
      %450 = vmatpush1.bf16.msra.mxu0 0
      %451 = vmatprep.subr.bf16.mxu0 0
      %452 = vmatpush1.bf16.msra.mxu0 0
      %453 = vmatprep.mubr.bf16.mxu0 0
      %454 = vmatmul.mubr.bf16.gmra.mrb[0].mxu0 %v374
      %v455 = vpop.f32.mrb[0].mxu0
      %v456 = vadd.f32 %v272, %v455
      %v457 = vpop.f32.mrb[0].mxu0
      %v458 = vpop.f32.mrb[0].mxu0
      %v459 = vadd.f32 %v272, %v458
      %v460 = vpop.f32.mrb[0].mxu0
      %461 = vmatprep.mubr.bf16.mxu0 0
      %462 = vmatmul.mubr.bf16.gmra.mrb[0].mxu0 %v377
      %v463 = vpop.f32.mrb[0].mxu0
      %v464 = vadd.f32 %v272, %v463
      %v465 = vpop.f32.mrb[0].mxu0
      %v466 = vpop.f32.mrb[0].mxu0
      %v467 = vadd.f32 %v272, %v466
      %v468 = vpop.f32.mrb[0].mxu0
      %469 = vmatprep.mubr.bf16.mxu0 0
      %470 = vmatmul.mubr.bf16.gmra.mrb[0].mxu0 %v380
      %v471 = vpop.f32.mrb[0].mxu0
      %v472 = vadd.f32 %v272, %v471
      %v473 = vpop.f32.mrb[0].mxu0
      %v474 = vpop.f32.mrb[0].mxu0
      %v475 = vadd.f32 %v272, %v474
      %v476 = vpop.f32.mrb[0].mxu0
      %477 = vmatprep.mubr.bf16.mxu0 0
      %478 = vmatmul.mubr.bf16.gmra.mrb[0].mxu0 %v383
      %v479 = vpop.f32.mrb[0].mxu0
      %v480 = vadd.f32 %v272, %v479
      %v481 = vpop.f32.mrb[0].mxu0
      %v482 = vpop.f32.mrb[0].mxu0
      %v483 = vadd.f32 %v272, %v482
      %v484 = vpop.f32.mrb[0].mxu0
      %485 = vmatprep.mubr.bf16.mxu0 0
      %486 = vmatmul.mubr.bf16.gmra.mrb[0].mxu0 %v386
      %v487 = vpop.f32.mrb[0].mxu0
      %v488 = vadd.f32 %v272, %v487
      %v489 = vpop.f32.mrb[0].mxu0
      %v490 = vpop.f32.mrb[0].mxu0
      %v491 = vadd.f32 %v272, %v490
      %v492 = vpop.f32.mrb[0].mxu0
      %493 = vmatprep.mubr.bf16.mxu0 0
      %494 = vmatmul.mubr.bf16.gmra.mrb[0].mxu0 %v389
      %v495 = vpop.f32.mrb[0].mxu0
      %v496 = vadd.f32 %v272, %v495
      %v497 = vpop.f32.mrb[0].mxu0
      %v498 = vpop.f32.mrb[0].mxu0
      %v499 = vadd.f32 %v272, %v498
      %v500 = vpop.f32.mrb[0].mxu0
      %501 = vmatprep.mubr.bf16.mxu0 0
      %502 = vmatmul.mubr.bf16.gmra.mrb[0].mxu0 %v392
      %v503 = vpop.f32.mrb[0].mxu0
      %v504 = vadd.f32 %v272, %v503
      %v505 = vpop.f32.mrb[0].mxu0
      %v506 = vpop.f32.mrb[0].mxu0
      %v507 = vadd.f32 %v272, %v506
      %v508 = vpop.f32.mrb[0].mxu0
      %509 = vmatprep.mubr.bf16.mxu0 0
      %510 = vmatmul.mubr.bf16.gmra.mrb[0].mxu0 %v395
      %v511 = vpop.f32.mrb[0].mxu0
      %v512 = vadd.f32 %v272, %v511
      %v513 = vpop.f32.mrb[0].mxu0
      %v514 = vpop.f32.mrb[0].mxu0
      %v515 = vadd.f32 %v272, %v514
      %v516 = vpop.f32.mrb[0].mxu0
      %517 = vmatprep.mubr.bf16.mxu0 0
      %518 = vmatmul.mubr.bf16.gmra.mrb[0].mxu0 %v398
      %v519 = vpop.f32.mrb[0].mxu0
      %v520 = vadd.f32 %v272, %v519
      %v521 = vpop.f32.mrb[0].mxu0
      %v522 = vpop.f32.mrb[0].mxu0
      %v523 = vadd.f32 %v272, %v522
      %v524 = vpop.f32.mrb[0].mxu0
      %525 = vmatprep.mubr.bf16.mxu0 0
      %526 = vmatmul.mubr.bf16.gmra.mrb[0].mxu0 %v401
      %v527 = vpop.f32.mrb[0].mxu0
      %v528 = vadd.f32 %v272, %v527
      %v529 = vpop.f32.mrb[0].mxu0
      %v530 = vpop.f32.mrb[0].mxu0
      %v531 = vadd.f32 %v272, %v530
      %v532 = vpop.f32.mrb[0].mxu0
      %533 = vmatprep.mubr.bf16.mxu0 0
      %534 = vmatmul.mubr.bf16.gmra.mrb[0].mxu0 %v404
      %v535 = vpop.f32.mrb[0].mxu0
      %v536 = vadd.f32 %v272, %v535
      %v537 = vpop.f32.mrb[0].mxu0
      %v538 = vpop.f32.mrb[0].mxu0
      %v539 = vadd.f32 %v272, %v538
      %v540 = vpop.f32.mrb[0].mxu0
      %541 = vmatprep.mubr.bf16.mxu0 0
      %542 = vmatmul.mubr.bf16.gmra.mrb[0].mxu0 %v407
      %v543 = vpop.f32.mrb[0].mxu0
      %v544 = vadd.f32 %v272, %v543
      %v545 = vpop.f32.mrb[0].mxu0
      %v546 = vpop.f32.mrb[0].mxu0
      %v547 = vadd.f32 %v272, %v546
      %v548 = vpop.f32.mrb[0].mxu0
      %549 = vmatprep.mubr.bf16.mxu0 0
      %550 = vmatmul.mubr.bf16.gmra.mrb[0].mxu0 %v410
      %v551 = vpop.f32.mrb[0].mxu0
      %v552 = vadd.f32 %v272, %v551
      %v553 = vpop.f32.mrb[0].mxu0
      %v554 = vpop.f32.mrb[0].mxu0
      %v555 = vadd.f32 %v272, %v554
      %v556 = vpop.f32.mrb[0].mxu0
      %557 = vmatprep.mubr.bf16.mxu0 0
      %558 = vmatmul.mubr.bf16.gmra.mrb[0].mxu0 %v413
      %v559 = vpop.f32.mrb[0].mxu0
      %v560 = vadd.f32 %v272, %v559
      %v561 = vpop.f32.mrb[0].mxu0
      %v562 = vpop.f32.mrb[0].mxu0
      %v563 = vadd.f32 %v272, %v562
      %v564 = vpop.f32.mrb[0].mxu0
      %565 = vmatprep.mubr.bf16.mxu0 0
      %566 = vmatmul.mubr.bf16.gmra.mrb[0].mxu0 %v416
      %v567 = vpop.f32.mrb[0].mxu0
      %v568 = vadd.f32 %v272, %v567
      %v569 = vpop.f32.mrb[0].mxu0
      %v570 = vpop.f32.mrb[0].mxu0
      %v571 = vadd.f32 %v272, %v570
      %v572 = vpop.f32.mrb[0].mxu0
      %573 = vmatprep.mubr.bf16.mxu0 0
      %574 = vmatmul.mubr.bf16.gmra.mrb[0].mxu0 %v419
      %v575 = vpop.f32.mrb[0].mxu0
      %v576 = vadd.f32 %v272, %v575
      %v577 = vpop.f32.mrb[0].mxu0
      %v578 = vpop.f32.mrb[0].mxu0
      %v579 = vadd.f32 %v272, %v578
      %v580 = vpop.f32.mrb[0].mxu0
      %581 = vdwg.mxu0
      %v582 = vmax.f32 %v456, 0.0
      %v583 = vmax.f32 %v459, 0.0
      %v584 = vmax.f32 %v464, 0.0
      %v585 = vmax.f32 %v467, 0.0
      %v586 = vmax.f32 %v472, 0.0
      %v587 = vmax.f32 %v475, 0.0
      %v588 = vmax.f32 %v480, 0.0
      %v589 = vmax.f32 %v483, 0.0
      %v590 = vmax.f32 %v488, 0.0
      %v591 = vmax.f32 %v491, 0.0
      %v592 = vmax.f32 %v496, 0.0
      %v593 = vmax.f32 %v499, 0.0
      %v594 = vmax.f32 %v504, 0.0
      %v595 = vmax.f32 %v507, 0.0
      %v596 = vmax.f32 %v512, 0.0
      %v597 = vmax.f32 %v515, 0.0
      %v598 = vmax.f32 %v520, 0.0
      %v599 = vmax.f32 %v523, 0.0
      %v600 = vmax.f32 %v528, 0.0
      %v601 = vmax.f32 %v531, 0.0
      %v602 = vmax.f32 %v536, 0.0
      %v603 = vmax.f32 %v539, 0.0
      %v604 = vmax.f32 %v544, 0.0
      %v605 = vmax.f32 %v547, 0.0
      %v606 = vmax.f32 %v552, 0.0
      %v607 = vmax.f32 %v555, 0.0
      %v608 = vmax.f32 %v560, 0.0
      %v609 = vmax.f32 %v563, 0.0
      %v610 = vmax.f32 %v568, 0.0
      %v611 = vmax.f32 %v571, 0.0
      %v612 = vmax.f32 %v576, 0.0
      %v613 = vmax.f32 %v579, 0.0
      %v614 = vpack.c.bf16 %v583, %v582
      %v615 = vpack.c.bf16 %v585, %v584
      %v616 = vpack.c.bf16 %v587, %v586
      %v617 = vpack.c.bf16 %v589, %v588
      %v618 = vpack.c.bf16 %v591, %v590
      %v619 = vpack.c.bf16 %v593, %v592
      %v620 = vpack.c.bf16 %v595, %v594
      %v621 = vpack.c.bf16 %v597, %v596
      %v622 = vpack.c.bf16 %v599, %v598
      %v623 = vpack.c.bf16 %v601, %v600
      %v624 = vpack.c.bf16 %v603, %v602
      %v625 = vpack.c.bf16 %v605, %v604
      %v626 = vpack.c.bf16 %v607, %v606
      %v627 = vpack.c.bf16 %v609, %v608
      %v628 = vpack.c.bf16 %v611, %v610
      %v629 = vpack.c.bf16 %v613, %v612
      %v630 = vld [vmem:[%s3] sm:$0xf]
      %v631 = vld [vmem:[%s3 + $0x4] sm:$0xf]
      %v632 = vld [vmem:[%s3 + $0x8] sm:$0xf]
      %v633 = vld [vmem:[%s3 + $0xc] sm:$0xf]
      %v634 = vld [vmem:[%s3 + $0x10] sm:$0xf]
      %v635 = vld [vmem:[%s3 + $0x14] sm:$0xf]
      %v636 = vld [vmem:[%s3 + $0x18] sm:$0xf]
      %v637 = vld [vmem:[%s3 + $0x1c] sm:$0xf]
      %v638 = vld [vmem:[%s3 + $0x20] sm:$0xf]
      %v639 = vld [vmem:[%s3 + $0x24] sm:$0xf]
      %v640 = vld [vmem:[%s3 + $0x28] sm:$0xf]
      %v641 = vld [vmem:[%s3 + $0x2c] sm:$0xf]
      %v642 = vld [vmem:[%s3 + $0x30] sm:$0xf]
      %v643 = vld [vmem:[%s3 + $0x34] sm:$0xf]
      %v644 = vld [vmem:[%s3 + $0x38] sm:$0xf]
      %v645 = vld [vmem:[%s3 + $0x3c] sm:$0xf]
      %v646 = vld [vmem:[%s4] sm:$0x1]
      %v648 = vlaneseq
      %v649 = vshrl.u32 %v648, 7
      %v650 = vsub.s32 0, %v649
      %v651 = vrot.slane %v646, %v650
      %v669 = vunpack.c.l.b16 %v630
      %v670 = vunpack.c.l.b16 %v631
      %v671 = vunpack.c.l.b16 %v632
      %v672 = vunpack.c.l.b16 %v633
      %v673 = vunpack.c.l.b16 %v634
      %v674 = vunpack.c.l.b16 %v635
      %v675 = vunpack.c.l.b16 %v636
      %v676 = vunpack.c.l.b16 %v637
      %v677 = vunpack.c.l.b16 %v638
      %v678 = vunpack.c.l.b16 %v639
      %v679 = vunpack.c.l.b16 %v640
      %v680 = vunpack.c.l.b16 %v641
      %v681 = vunpack.c.l.b16 %v642
      %v682 = vunpack.c.l.b16 %v643
      %v683 = vunpack.c.l.b16 %v644
      %v684 = vunpack.c.l.b16 %v645
      %v685 = vpack.c.b16 %v670, %v669
      %v686 = vpack.c.b16 %v672, %v671
      %v687 = vpack.c.b16 %v674, %v673
      %v688 = vpack.c.b16 %v676, %v675
      %v689 = vpack.c.b16 %v678, %v677
      %v690 = vpack.c.b16 %v680, %v679
      %v691 = vpack.c.b16 %v682, %v681
      %v692 = vpack.c.b16 %v684, %v683
      %701 = vmatprep.subr.bf16.mxu0 0
      %702 = vmatpush1.bf16.msra.mxu0 %v685
      %703 = vmatprep.subr.bf16.mxu0 0
      %704 = vmatpush1.bf16.msra.mxu0 %v686
      %705 = vmatprep.subr.bf16.mxu0 0
      %706 = vmatpush1.bf16.msra.mxu0 %v687
      %707 = vmatprep.subr.bf16.mxu0 0
      %708 = vmatpush1.bf16.msra.mxu0 %v688
      %709 = vmatprep.subr.bf16.mxu0 0
      %710 = vmatpush1.bf16.msra.mxu0 %v689
      %711 = vmatprep.subr.bf16.mxu0 0
      %712 = vmatpush1.bf16.msra.mxu0 %v690
      %713 = vmatprep.subr.bf16.mxu0 0
      %714 = vmatpush1.bf16.msra.mxu0 %v691
      %715 = vmatprep.subr.bf16.mxu0 0
      %716 = vmatpush1.bf16.msra.mxu0 %v692
      %717 = vmatprep.subr.bf16.mxu0 0
      %718 = vmatpush1.bf16.msra.mxu0 0
      %719 = vmatprep.subr.bf16.mxu0 0
      %720 = vmatpush1.bf16.msra.mxu0 0
      %721 = vmatprep.subr.bf16.mxu0 0
      %722 = vmatpush1.bf16.msra.mxu0 0
      %723 = vmatprep.subr.bf16.mxu0 0
      %724 = vmatpush1.bf16.msra.mxu0 0
      %725 = vmatprep.subr.bf16.mxu0 0
      %726 = vmatpush1.bf16.msra.mxu0 0
      %727 = vmatprep.subr.bf16.mxu0 0
      %728 = vmatpush1.bf16.msra.mxu0 0
      %729 = vmatprep.subr.bf16.mxu0 0
      %730 = vmatpush1.bf16.msra.mxu0 0
      %731 = vmatprep.subr.bf16.mxu0 0
      %732 = vmatpush1.bf16.msra.mxu0 0
      %733 = vmatprep.mubr.bf16.mxu0 0
      %734 = vmatmul.mubr.bf16.gmra.mrb[0].mxu0 %v614
      %v735 = vpop.f32.mrb[0].mxu0
      %v736 = vadd.f32 %v651, %v735
      %v737 = vpop.f32.mrb[0].mxu0
      %v738 = vpop.f32.mrb[0].mxu0
      %v739 = vadd.f32 %v651, %v738
      %v740 = vpop.f32.mrb[0].mxu0
      %741 = vmatprep.mubr.bf16.mxu0 0
      %742 = vmatmul.mubr.bf16.gmra.mrb[0].mxu0 %v615
      %v743 = vpop.f32.mrb[0].mxu0
      %v744 = vadd.f32 %v651, %v743
      %v745 = vpop.f32.mrb[0].mxu0
      %v746 = vpop.f32.mrb[0].mxu0
      %v747 = vadd.f32 %v651, %v746
      %v748 = vpop.f32.mrb[0].mxu0
      %749 = vmatprep.mubr.bf16.mxu0 0
      %750 = vmatmul.mubr.bf16.gmra.mrb[0].mxu0 %v616
      %v751 = vpop.f32.mrb[0].mxu0
      %v752 = vadd.f32 %v651, %v751
      %v753 = vpop.f32.mrb[0].mxu0
      %v754 = vpop.f32.mrb[0].mxu0
      %v755 = vadd.f32 %v651, %v754
      %v756 = vpop.f32.mrb[0].mxu0
      %757 = vmatprep.mubr.bf16.mxu0 0
      %758 = vmatmul.mubr.bf16.gmra.mrb[0].mxu0 %v617
      %v759 = vpop.f32.mrb[0].mxu0
      %v760 = vadd.f32 %v651, %v759
      %v761 = vpop.f32.mrb[0].mxu0
      %v762 = vpop.f32.mrb[0].mxu0
      %v763 = vadd.f32 %v651, %v762
      %v764 = vpop.f32.mrb[0].mxu0
      %765 = vmatprep.mubr.bf16.mxu0 0
      %766 = vmatmul.mubr.bf16.gmra.mrb[0].mxu0 %v618
      %v767 = vpop.f32.mrb[0].mxu0
      %v768 = vadd.f32 %v651, %v767
      %v769 = vpop.f32.mrb[0].mxu0
      %v770 = vpop.f32.mrb[0].mxu0
      %v771 = vadd.f32 %v651, %v770
      %v772 = vpop.f32.mrb[0].mxu0
      %773 = vmatprep.mubr.bf16.mxu0 0
      %774 = vmatmul.mubr.bf16.gmra.mrb[0].mxu0 %v619
      %v775 = vpop.f32.mrb[0].mxu0
      %v776 = vadd.f32 %v651, %v775
      %v777 = vpop.f32.mrb[0].mxu0
      %v778 = vpop.f32.mrb[0].mxu0
      %v779 = vadd.f32 %v651, %v778
      %v780 = vpop.f32.mrb[0].mxu0
      %781 = vmatprep.mubr.bf16.mxu0 0
      %782 = vmatmul.mubr.bf16.gmra.mrb[0].mxu0 %v620
      %v783 = vpop.f32.mrb[0].mxu0
      %v784 = vadd.f32 %v651, %v783
      %v785 = vpop.f32.mrb[0].mxu0
      %v786 = vpop.f32.mrb[0].mxu0
      %v787 = vadd.f32 %v651, %v786
      %v788 = vpop.f32.mrb[0].mxu0
      %789 = vmatprep.mubr.bf16.mxu0 0
      %790 = vmatmul.mubr.bf16.gmra.mrb[0].mxu0 %v621
      %v791 = vpop.f32.mrb[0].mxu0
      %v792 = vadd.f32 %v651, %v791
      %v793 = vpop.f32.mrb[0].mxu0
      %v794 = vpop.f32.mrb[0].mxu0
      %v795 = vadd.f32 %v651, %v794
      %v796 = vpop.f32.mrb[0].mxu0
      %797 = vmatprep.mubr.bf16.mxu0 0
      %798 = vmatmul.mubr.bf16.gmra.mrb[0].mxu0 %v622
      %v799 = vpop.f32.mrb[0].mxu0
      %v800 = vadd.f32 %v651, %v799
      %v801 = vpop.f32.mrb[0].mxu0
      %v802 = vpop.f32.mrb[0].mxu0
      %v803 = vadd.f32 %v651, %v802
      %v804 = vpop.f32.mrb[0].mxu0
      %805 = vmatprep.mubr.bf16.mxu0 0
      %806 = vmatmul.mubr.bf16.gmra.mrb[0].mxu0 %v623
      %v807 = vpop.f32.mrb[0].mxu0
      %v808 = vadd.f32 %v651, %v807
      %v809 = vpop.f32.mrb[0].mxu0
      %v810 = vpop.f32.mrb[0].mxu0
      %v811 = vadd.f32 %v651, %v810
      %v812 = vpop.f32.mrb[0].mxu0
      %813 = vmatprep.mubr.bf16.mxu0 0
      %814 = vmatmul.mubr.bf16.gmra.mrb[0].mxu0 %v624
      %v815 = vpop.f32.mrb[0].mxu0
      %v816 = vadd.f32 %v651, %v815
      %v817 = vpop.f32.mrb[0].mxu0
      %v818 = vpop.f32.mrb[0].mxu0
      %v819 = vadd.f32 %v651, %v818
      %v820 = vpop.f32.mrb[0].mxu0
      %821 = vmatprep.mubr.bf16.mxu0 0
      %822 = vmatmul.mubr.bf16.gmra.mrb[0].mxu0 %v625
      %v823 = vpop.f32.mrb[0].mxu0
      %v824 = vadd.f32 %v651, %v823
      %v825 = vpop.f32.mrb[0].mxu0
      %v826 = vpop.f32.mrb[0].mxu0
      %v827 = vadd.f32 %v651, %v826
      %v828 = vpop.f32.mrb[0].mxu0
      %829 = vmatprep.mubr.bf16.mxu0 0
      %830 = vmatmul.mubr.bf16.gmra.mrb[0].mxu0 %v626
      %v831 = vpop.f32.mrb[0].mxu0
      %v832 = vadd.f32 %v651, %v831
      %v833 = vpop.f32.mrb[0].mxu0
      %v834 = vpop.f32.mrb[0].mxu0
      %v835 = vadd.f32 %v651, %v834
      %v836 = vpop.f32.mrb[0].mxu0
      %837 = vmatprep.mubr.bf16.mxu0 0
      %838 = vmatmul.mubr.bf16.gmra.mrb[0].mxu0 %v627
      %v839 = vpop.f32.mrb[0].mxu0
      %v840 = vadd.f32 %v651, %v839
      %v841 = vpop.f32.mrb[0].mxu0
      %v842 = vpop.f32.mrb[0].mxu0
      %v843 = vadd.f32 %v651, %v842
      %v844 = vpop.f32.mrb[0].mxu0
      %845 = vmatprep.mubr.bf16.mxu0 0
      %846 = vmatmul.mubr.bf16.gmra.mrb[0].mxu0 %v628
      %v847 = vpop.f32.mrb[0].mxu0
      %v848 = vadd.f32 %v651, %v847
      %v849 = vpop.f32.mrb[0].mxu0
      %v850 = vpop.f32.mrb[0].mxu0
      %v851 = vadd.f32 %v651, %v850
      %v852 = vpop.f32.mrb[0].mxu0
      %853 = vmatprep.mubr.bf16.mxu0 0
      %854 = vmatmul.mubr.bf16.gmra.mrb[0].mxu0 %v629
      %v855 = vpop.f32.mrb[0].mxu0
      %v856 = vadd.f32 %v651, %v855
      %v857 = vpop.f32.mrb[0].mxu0
      %v858 = vpop.f32.mrb[0].mxu0
      %v859 = vadd.f32 %v651, %v858
      %v860 = vpop.f32.mrb[0].mxu0
      %861 = vdwg.mxu0
      %862 = vst [vmem:[%s226] sm:$0xff] %v736
      %863 = vst [vmem:[%s226 + $0x8] sm:$0xff] %v739
      %864 = vst [vmem:[%s226 + $0x10] sm:$0xff] %v744
      %865 = vst [vmem:[%s226 + $0x18] sm:$0xff] %v747
      %866 = vst [vmem:[%s226 + $0x20] sm:$0xff] %v752
      %867 = vst [vmem:[%s226 + $0x28] sm:$0xff] %v755
      %868 = vst [vmem:[%s226 + $0x30] sm:$0xff] %v760
      %869 = vst [vmem:[%s226 + $0x38] sm:$0xff] %v763
      %870 = vst [vmem:[%s226 + $0x40] sm:$0xff] %v768
      %871 = vst [vmem:[%s226 + $0x48] sm:$0xff] %v771
      %872 = vst [vmem:[%s226 + $0x50] sm:$0xff] %v776
      %873 = vst [vmem:[%s226 + $0x58] sm:$0xff] %v779
      %874 = vst [vmem:[%s226 + $0x60] sm:$0xff] %v784
      %875 = vst [vmem:[%s226 + $0x68] sm:$0xff] %v787
      %876 = vst [vmem:[%s226 + $0x70] sm:$0xff] %v792
      %877 = vst [vmem:[%s226 + $0x78] sm:$0xff] %v795
      %878 = vst [vmem:[%s226 + $0x80] sm:$0xff] %v800
      %879 = vst [vmem:[%s226 + $0x88] sm:$0xff] %v803
      %880 = vst [vmem:[%s226 + $0x90] sm:$0xff] %v808
      %881 = vst [vmem:[%s226 + $0x98] sm:$0xff] %v811
      %882 = vst [vmem:[%s226 + $0xa0] sm:$0xff] %v816
      %883 = vst [vmem:[%s226 + $0xa8] sm:$0xff] %v819
      %884 = vst [vmem:[%s226 + $0xb0] sm:$0xff] %v824
      %885 = vst [vmem:[%s226 + $0xb8] sm:$0xff] %v827
      %886 = vst [vmem:[%s226 + $0xc0] sm:$0xff] %v832
      %887 = vst [vmem:[%s226 + $0xc8] sm:$0xff] %v835
      %888 = vst [vmem:[%s226 + $0xd0] sm:$0xff] %v840
      %889 = vst [vmem:[%s226 + $0xd8] sm:$0xff] %v843
      %890 = vst [vmem:[%s226 + $0xe0] sm:$0xff] %v848
      %891 = vst [vmem:[%s226 + $0xe8] sm:$0xff] %v851
      %892 = vst [vmem:[%s226 + $0xf0] sm:$0xff] %v856
      %893 = vst [vmem:[%s226 + $0xf8] sm:$0xff] %v859
      %s894 = smul.u32 32, %s16
      %p895 = scmp.lt.s32.totalorder %s894, 63
      %s896 = scalar_select %p895, %s894, 63
      %s897 = smul.addr %s896, 8
      %s898 = scalar_lea.vmem %s5, %s897
      // Predicated region
      $region41: #{bayesnet_forward.1} parent=39 // pred_check
        %p899 = pneg %p144
      $region42: #{bayesnet_forward.1} parent=39 // pred_check_branch
        %901 = sbr.rel (%p899) target = $region44
      $region43: #{bayesnet_forward.1} parent=39 // pred_region
        %s902 = smul.u32 32, %s16
      $region44: #{bayesnet_forward.1} parent=39 // pred_fallthru
        _
    $region40: #{bayesnet_forward.1} parent=5 // pred_fallthru
      _
    %p903 = scmp.le.s32.totalorder 2, %s11
    // Predicated region
    $region45: #{bayesnet_forward.1} parent=5 // pred_check
      %p904 = pneg %p903
    $region46: #{bayesnet_forward.1} parent=5 // pred_check_branch
      %906 = sbr.rel (%p904) target = $region48
    $region47: #{bayesnet_forward.1} parent=5 // pred_region
      %s907 = ssub.s32 %s11, 2
      // Predicated region
      $region49: #{bayesnet_forward.1} parent=47 // pred_check
        %p908 = pneg %p150
      $region50: #{bayesnet_forward.1} parent=47 // pred_check_branch
        %910 = sbr.rel (%p908) target = $region52
      $region51: #{bayesnet_forward.1} parent=47 // pred_region
        %s911 = smul.u32 32, %s17
        %p912 = scmp.lt.s32.totalorder %s911, 63
        %s913 = scalar_select %p912, %s911, 63
        %s914 = smul.addr %s913, 8
        %s915 = scalar_lea.vmem %s5, %s914
      $region52: #{bayesnet_forward.1} parent=47 // pred_fallthru
        _
    $region48: #{bayesnet_forward.1} parent=5 // pred_fallthru
      _
  $region6: #{bayesnet_forward.1} parent=0 // loop_footer
    %s15 = sadd.s32 1, %s11
  $region7: #{bayesnet_forward.1} parent=0 // loop_footer_branch
    %10 = sbr.rel target = $region3
  $region8: #{bayesnet_forward.1} parent=0 // loop_exit
    _

</llo_original>
